<compile_context>
chip_gen: v6e
topology: v6e:2x2x1
jax: 0.10.0
libtpu: 0.0.40
codegen_flags: <defaults>
</compile_context>

<pallas_src>
import functools

import jax
import jax.numpy as jnp
from jax.experimental import pallas as pl
from jax.experimental.pallas import tpu as pltpu


def _round_up(x, m):
    return ((x + m - 1) // m) * m


def _sync_encoder_norm_kernel(*refs, feat, groups):
    if groups > 1:
        x_ref, g_ref, alpha_ref, bias_ref, o_ref = refs
    else:
        x_ref, alpha_ref, bias_ref, o_ref = refs
        g_ref = None

    x = x_ref[...].astype(jnp.float32)          # (row_tile, lane_width)
    alpha = alpha_ref[...]                      # (1, lane_width), f32
    bias = bias_ref[...]                        # (1, lane_width), f32

    eps = jnp.float32(1e-6)
    inv_f = jnp.float32(1.0 / feat)
    inv_fm1 = jnp.float32(1.0 / (feat - 1))     # unbiased (ddof=1) variance

    if g_ref is not None:
        # Block-diagonal group-sum-broadcast on the (otherwise idle) MXU:
        # G[k, j] = 1 iff lanes k and j belong to the same F-wide group.
        g = g_ref[...]                          # (lane_width, lane_width), f32
        mean = jnp.dot(x, g, preferred_element_type=jnp.float32) * inv_f
        diff = x - mean
        var = jnp.dot(diff * diff, g, preferred_element_type=jnp.float32) * inv_fm1
    else:
        mean = jnp.sum(x, axis=-1, keepdims=True) * inv_f
        diff = x - mean
        var = jnp.sum(diff * diff, axis=-1, keepdims=True) * inv_fm1

    # Full-precision divide (approx=False); perf-neutral: kernel is HBM-bound.
    inv_std = pl.reciprocal(jnp.sqrt(var) + eps, approx=False)
    o_ref[...] = (alpha * diff * inv_std + bias).astype(o_ref.dtype)


def sync_encoder_forward(x, alpha, bias, mask=None, *, row_tile=None):
    """SyncEncoder.forward. x: [B, S, F]; alpha, bias: [F]. Returns [B, S, F]."""
    del mask  # accepted for interface fidelity; layers list is empty
    B, S, F = x.shape
    assert F >= 2, "unbiased std needs at least 2 features (F-1 divisor)"
    R = B * S
    itemsize = jnp.dtype(x.dtype).itemsize
    out_dtype = jnp.result_type(x.dtype, alpha.dtype, bias.dtype)
    out_itemsize = jnp.dtype(out_dtype).itemsize

    # --- lane packing: fold rows into the lane axis when F < 128 -------------
    groups = 128 // F if (F < 128 and 128 % F == 0) else 1
    lane_width = groups * F

    x2d = x.reshape(R, F)
    rows_pad = (-R) % groups
    if rows_pad:
        # Only <= groups-1 rows; zero rows normalize to `bias` (finite).
        x2d = jnp.pad(x2d, ((0, rows_pad), (0, 0)))
    Rp = (R + rows_pad) // groups
    x2d = x2d.reshape(Rp, lane_width)           # free row-major reshape

    alpha_l = jnp.tile(alpha.astype(jnp.float32), groups).reshape(1, lane_width)
    bias_l = jnp.tile(bias.astype(jnp.float32), groups).reshape(1, lane_width)

    # --- VMEM-aware, packing-aligned row tile --------------------------------
    pack = max(1, 4 // itemsize)                # rows per sublane (f32:1 bf16:2 i8:4)
    mult = 8 * pack                             # sublane-tile-aligned row multiple

    try:
        vmem_cap = int(pltpu.get_tpu_info().vmem_capacity_bytes)
    except Exception:
        vmem_cap = 64 * 1024 * 1024             # conservative (v7x-sized) fallback
    vmem_limit = min(int(vmem_cap * 0.75), 96 * 1024 * 1024)

    if row_tile is None:
        # Per row: in+out double-buffered + ~4 f32 temporaries in the body.
        per_row_bytes = lane_width * (2 * itemsize + 2 * out_itemsize + 4 * 4)
        max_rows = max(mult, (vmem_limit // 2) // max(per_row_bytes, 1))
        row_tile = min(2048, max_rows)          # roofline knee is ~512-1024 rows

    # Guarantee >= 2 grid steps when possible so v7x megacore shards the rows.
    row_tile = min(row_tile, _round_up(pl.cdiv(Rp, 2), mult))
    row_tile = max(mult, (row_tile // mult) * mult)
    if row_tile >= Rp:
        row_tile = Rp                           # single full block (always legal)

    grid = (pl.cdiv(Rp, row_tile),)             # ragged last block handled by Pallas

    inputs = [x2d]
    in_specs = [pl.BlockSpec((row_tile, lane_width), lambda i: (i, 0))]
    if groups > 1:
        ids = jnp.arange(lane_width, dtype=jnp.int32) // F
        G = (ids[:, None] == ids[None, :]).astype(jnp.float32)  # block-diag ones
        inputs.append(G)
        in_specs.append(pl.BlockSpec((lane_width, lane_width), lambda i: (0, 0)))
    inputs += [alpha_l, bias_l]
    in_specs += [pl.BlockSpec((1, lane_width), lambda i: (0, 0)),
                 pl.BlockSpec((1, lane_width), lambda i: (0, 0))]

    flops = 6 * R * F
    if groups > 1:
        flops += 4 * Rp * lane_width * lane_width  # two block-diag matmuls
    cost = pl.CostEstimate(
        flops=flops,
        transcendentals=2 * R,
        bytes_accessed=R * F * (itemsize + out_itemsize) + 2 * lane_width * 4,
    )

    kernel = functools.partial(_sync_encoder_norm_kernel, feat=F, groups=groups)

    out2d = pl.pallas_call(
        kernel,
        out_shape=jax.ShapeDtypeStruct((Rp, lane_width), out_dtype),
        grid_spec=pltpu.PrefetchScalarGridSpec(
            num_scalar_prefetch=0,
            grid=grid,
            in_specs=in_specs,
            out_specs=pl.BlockSpec((row_tile, lane_width), lambda i: (i, 0)),
        ),
        compiler_params=pltpu.CompilerParams(
            dimension_semantics=("parallel",),   # shards rows across TCs on v7x
            vmem_limit_bytes=int(vmem_limit),
        ),
        cost_estimate=cost,
    )(*inputs)

    out2d = out2d.reshape(Rp * groups, F)
    if rows_pad:
        out2d = out2d[:R]
    return out2d.reshape(B, S, F)


def _reference(x, alpha, bias, eps=1e-6):
    F = x.shape[-1]
    mean = jnp.mean(x, axis=-1, keepdims=True)
    std = jnp.sqrt(jnp.sum((x - mean) ** 2, axis=-1, keepdims=True) / (F - 1))
    return alpha * (x - mean) / (std + eps) + bias


if __name__ == "__main__":
    key = jax.random.PRNGKey(0)
    B, S, F = 2, 8, 32

    k_x, k_a, k_b = jax.random.split(key, 3)
    x = jax.random.normal(k_x, (B, S, F), dtype=jnp.float32)

    # TODO(synk): `layers` ModuleList is injected externally with no concrete
    # type in this module; reproduced as an empty list (identity loop). The
    # unused `self.linear` from __init__ is omitted (never used in forward).

    # 1) Module-init parameters (alpha=ones, bias=zeros).
    alpha0 = jnp.ones((F,), dtype=jnp.float32)
    bias0 = jnp.zeros((F,), dtype=jnp.float32)
    out0 = jax.block_until_ready(sync_encoder_forward(x, alpha0, bias0))
    ref0 = _reference(x, alpha0, bias0)
    assert jnp.allclose(out0, ref0, atol=1e-5, rtol=1e-5), "mismatch (init params)"

    # 2) Non-trivial affine parameters to exercise the scale/shift path.
    alpha1 = 1.0 + 0.1 * jax.random.normal(k_a, (F,), dtype=jnp.float32)
    bias1 = 0.1 * jax.random.normal(k_b, (F,), dtype=jnp.float32)
    out1 = jax.block_until_ready(sync_encoder_forward(x, alpha1, bias1))
    ref1 = _reference(x, alpha1, bias1)
    assert jnp.allclose(out1, ref1, atol=1e-5, rtol=1e-5), "mismatch (affine params)"

    print("KERNEL_OK")
</pallas_src>

<mosaic_0001>
module attributes {stable_mosaic.version = 11 : i64} {
  func.func @_sync_encoder_norm_kernel(%arg0: i32, %arg1: memref<4x128xf32, #tpu.memory_space<vmem>>, %arg2: memref<128x128xf32, #tpu.memory_space<vmem>>, %arg3: memref<1x128xf32, #tpu.memory_space<vmem>>, %arg4: memref<1x128xf32, #tpu.memory_space<vmem>>, %arg5: memref<4x128xf32, #tpu.memory_space<vmem>>) attributes {dimension_semantics = [#tpu.dimension_semantics<parallel>], iteration_bounds = array<i64: 1>, scalar_prefetch = 0 : i64, scratch_operands = 0 : i64, tpu.core_type = #tpu.core_type<tc>, window_params = [{transform_indices = @transform_0, window_bounds = array<i64: 4, 128>}, {pipeline_mode = #tpu.pipeline_mode<synchronous>, transform_indices = @transform_1, window_bounds = array<i64: 128, 128>}, {pipeline_mode = #tpu.pipeline_mode<synchronous>, transform_indices = @transform_2, window_bounds = array<i64: 1, 128>}, {pipeline_mode = #tpu.pipeline_mode<synchronous>, transform_indices = @transform_3, window_bounds = array<i64: 1, 128>}, {transform_indices = @transform_4, window_bounds = array<i64: 4, 128>}]} {
    %c0 = arith.constant 0 : index
    %c0_0 = arith.constant 0 : index
    %0 = vector.load %arg1[%c0, %c0_0] : memref<4x128xf32, #tpu.memory_space<vmem>>, vector<4x128xf32>
    %c0_1 = arith.constant 0 : index
    %c0_2 = arith.constant 0 : index
    %1 = vector.load %arg3[%c0_1, %c0_2] : memref<1x128xf32, #tpu.memory_space<vmem>>, vector<1x128xf32>
    %c0_3 = arith.constant 0 : index
    %c0_4 = arith.constant 0 : index
    %2 = vector.load %arg4[%c0_3, %c0_4] : memref<1x128xf32, #tpu.memory_space<vmem>>, vector<1x128xf32>
    %c0_5 = arith.constant 0 : index
    %c0_6 = arith.constant 0 : index
    %3 = vector.load %arg2[%c0_5, %c0_6] : memref<128x128xf32, #tpu.memory_space<vmem>>, vector<128x128xf32>
    %cst = arith.constant dense<0.000000e+00> : vector<4x128xf32>
    %4 = tpu.matmul %0, %3, %cst {dimension_numbers = #tpu.dot_dimension_numbers<[1], [0], [0], [1], [0, 0, 1, 1], [], []>} : vector<4x128xf32>, vector<128x128xf32>, vector<4x128xf32> -> vector<4x128xf32>
    %cst_7 = arith.constant 3.125000e-02 : f32
    %5 = vector.broadcast %cst_7 : f32 to vector<4x128xf32>
    %6 = arith.mulf %4, %5 : vector<4x128xf32>
    %7 = arith.subf %0, %6 : vector<4x128xf32>
    %8 = arith.mulf %7, %7 : vector<4x128xf32>
    %cst_8 = arith.constant dense<0.000000e+00> : vector<4x128xf32>
    %9 = tpu.matmul %8, %3, %cst_8 {dimension_numbers = #tpu.dot_dimension_numbers<[1], [0], [0], [1], [0, 0, 1, 1], [], []>} : vector<4x128xf32>, vector<128x128xf32>, vector<4x128xf32> -> vector<4x128xf32>
    %cst_9 = arith.constant 0.0322580636 : f32
    %10 = vector.broadcast %cst_9 : f32 to vector<4x128xf32>
    %11 = arith.mulf %9, %10 : vector<4x128xf32>
    %12 = math.sqrt %11 : vector<4x128xf32>
    %cst_10 = arith.constant 9.99999997E-7 : f32
    %13 = vector.broadcast %cst_10 : f32 to vector<4x128xf32>
    %14 = arith.addf %12, %13 : vector<4x128xf32>
    %15 = tpu.reciprocal %14 : vector<4x128xf32> -> vector<4x128xf32>
    %16 = vector.broadcast %1 : vector<1x128xf32> to vector<4x128xf32>
    %17 = arith.mulf %16, %7 : vector<4x128xf32>
    %18 = arith.mulf %17, %15 : vector<4x128xf32>
    %19 = vector.broadcast %2 : vector<1x128xf32> to vector<4x128xf32>
    %20 = arith.addf %18, %19 : vector<4x128xf32>
    %c0_11 = arith.constant 0 : index
    %c0_12 = arith.constant 0 : index
    %21 = vector.load %arg5[%c0_11, %c0_12] : memref<4x128xf32, #tpu.memory_space<vmem>>, vector<4x128xf32>
    tpu.vector_store %arg5[%c0_11, %c0_12], %20 {strides = array<i32>} : memref<4x128xf32, #tpu.memory_space<vmem>>, vector<4x128xf32>,
    return
  }
  func.func @transform_0(%arg0: i32) -> (i32, i32) {
    %c0_i32 = arith.constant 0 : i32
    %c0_i32_0 = arith.constant 0 : i32
    return %arg0, %c0_i32 : i32, i32
  }
  func.func @transform_1(%arg0: i32) -> (i32, i32) {
    %c0_i32 = arith.constant 0 : i32
    %c0_i32_0 = arith.constant 0 : i32
    %c0_i32_1 = arith.constant 0 : i32
    return %c0_i32, %c0_i32_0 : i32, i32
  }
  func.func @transform_2(%arg0: i32) -> (i32, i32) {
    %c0_i32 = arith.constant 0 : i32
    %c0_i32_0 = arith.constant 0 : i32
    %c0_i32_1 = arith.constant 0 : i32
    return %c0_i32, %c0_i32_0 : i32, i32
  }
  func.func @transform_3(%arg0: i32) -> (i32, i32) {
    %c0_i32 = arith.constant 0 : i32
    %c0_i32_0 = arith.constant 0 : i32
    %c0_i32_1 = arith.constant 0 : i32
    return %c0_i32, %c0_i32_0 : i32, i32
  }
  func.func @transform_4(%arg0: i32) -> (i32, i32) {
    %c0_i32 = arith.constant 0 : i32
    %c0_i32_0 = arith.constant 0 : i32
    return %arg0, %c0_i32 : i32, i32
  }
}

</mosaic_0001>

<llo_original>
// kernel: tpu_custom_call.1
$region0: #{tpu_custom_call.1}
  #allocation0 [shape = 'u32[]', space=smem, size = 0x4, offset = 0x4, fixed_abs, tag = 'smem constant byte address 0x4 - core index']
  #allocation1 [shape = 'u32[144,128]{1,0:T(1,128)}', space=vmem, size = 0x12000, scoped, tag = 'internal scratch']
  %s0 = inlined_call_operand.hbm [shape: f32[4,128], index: 0, kind: input, shape index: {}]
  %s1 = inlined_call_operand.hbm [shape: f32[128,128], index: 1, kind: input, shape index: {}]
  %s2 = inlined_call_operand.vmem [shape: f32[1,128], index: 2, kind: input, shape index: {}]
  %s3 = inlined_call_operand.vmem [shape: f32[1,128], index: 3, kind: input, shape index: {}]
  %s4 = inlined_call_operand.hbm [shape: f32[4,128], index: 4, kind: output, shape index: {}]
  %s5 = sld [smem:[#allocation0]]
  $region34: #{tpu_custom_call.1} parent=0
    _
  %s7 = ssub.s32 1, %s5
  %s8 = scalar_select 0, %s7, %s5
  $region1: #{tpu_custom_call.1} parent=0
    #allocation2 [shape = 'u8[2048]{0}', space=vmem, size = 0x800, scoped, tag = 'input window, operand 0, single buffered']
    #allocation3 [shape = 's32[1]{0}', space=sflag, size = 0x4, scoped, tag = 'scoped memory for tpu_custom_call.1']
    #allocation4 [shape = 's32[1]{0}', space=sflag, size = 0x4, scoped, tag = 'scoped memory for tpu_custom_call.1']
    #allocation5 [shape = 'u8[65536]{0}', space=vmem, size = 0x10000, scoped, tag = 'input window, operand 1, single buffered']
    #allocation6 [shape = 's32[1]{0}', space=sflag, size = 0x4, scoped, tag = 'scoped memory for tpu_custom_call.1']
    #allocation7 [shape = 'u8[2048]{0}', space=vmem, size = 0x800, scoped, tag = 'output window, operand 0, single buffered']
    %9 = vsyncpa [#allocation3], 0
    %10 = vsyncpa [#allocation6], 0
    %11 = vsyncpa [#allocation4], 0
    // Predicated region
    $region2: #{tpu_custom_call.1} parent=1 // pred_check
      _
    $region3: #{tpu_custom_call.1} parent=1 // pred_check_branch
      %13 = sbr.rel (0) target = $region5
    $region4: #{tpu_custom_call.1} parent=1 // pred_region
      %s15 = ssub.s32 64, 64
      %16 = vsyncadd [#allocation3], %s15
      %s18 = sshll.u32 [#allocation2], 4
      %s19 = int_to_ptr.vmem [resolvable:$true] %s18
      %21 = dma.hbm_to_vmem [thread:$0]  %s0, 64, %s19, [#allocation3]
    $region5: #{tpu_custom_call.1} parent=1 // pred_fallthru
      _
    // Predicated region
    $region6: #{tpu_custom_call.1} parent=1 // pred_check
      _
    $region7: #{tpu_custom_call.1} parent=1 // pred_check_branch
      %23 = sbr.rel (0) target = $region9
    $region8: #{tpu_custom_call.1} parent=1 // pred_region
      %s25 = ssub.s32 2048, 2048
      %26 = vsyncadd [#allocation6], %s25
      %s27 = sshll.u32 [#allocation5], 4
      %s28 = int_to_ptr.vmem [resolvable:$true] %s27
      %33 = dma.hbm_to_vmem [thread:$0]  %s1, 2048, %s28, [#allocation6], 128, 128, 8
    $region9: #{tpu_custom_call.1} parent=1 // pred_fallthru
      _
    // Predicated region
    $region10: #{tpu_custom_call.1} parent=1 // pred_check
      _
    $region11: #{tpu_custom_call.1} parent=1 // pred_check_branch
      %35 = sbr.rel (0) target = $region13
    $region12: #{tpu_custom_call.1} parent=1 // pred_region
      _
    $region13: #{tpu_custom_call.1} parent=1 // pred_fallthru
      _
    // Predicated region
    $region14: #{tpu_custom_call.1} parent=1 // pred_check
      _
    $region15: #{tpu_custom_call.1} parent=1 // pred_check_branch
      %37 = sbr.rel (0) target = $region17
    $region16: #{tpu_custom_call.1} parent=1 // pred_region
      _
    $region17: #{tpu_custom_call.1} parent=1 // pred_fallthru
      _
    // Predicated region
    $region18: #{tpu_custom_call.1} parent=1 // pred_check
      _
    $region19: #{tpu_custom_call.1} parent=1 // pred_check_branch
      %39 = sbr.rel (0) target = $region21
    $region20: #{tpu_custom_call.1} parent=1 // pred_region
      %40 = dma.done [#allocation3], 64
    $region21: #{tpu_custom_call.1} parent=1 // pred_fallthru
      _
    // Predicated region
    $region22: #{tpu_custom_call.1} parent=1 // pred_check
      _
    $region23: #{tpu_custom_call.1} parent=1 // pred_check_branch
      %42 = sbr.rel (0) target = $region25
    $region24: #{tpu_custom_call.1} parent=1 // pred_region
      %43 = dma.done [#allocation6], 2048
    $region25: #{tpu_custom_call.1} parent=1 // pred_fallthru
      _
    %v44 = vld [vmem:[#allocation2] sm:$0xf]
    %v45 = vld [vmem:[%s2] sm:$0x1]
    %v46 = vld [vmem:[%s3] sm:$0x1]
    %v47 = vld [vmem:[#allocation5] sm:$0xff]
    %v48 = vld [vmem:[#allocation5 + $0x8] sm:$0xff]
    %v49 = vld [vmem:[#allocation5 + $0x10] sm:$0xff]
    %v50 = vld [vmem:[#allocation5 + $0x18] sm:$0xff]
    %v51 = vld [vmem:[#allocation5 + $0x20] sm:$0xff]
    %v52 = vld [vmem:[#allocation5 + $0x28] sm:$0xff]
    %v53 = vld [vmem:[#allocation5 + $0x30] sm:$0xff]
    %v54 = vld [vmem:[#allocation5 + $0x38] sm:$0xff]
    %v55 = vld [vmem:[#allocation5 + $0x40] sm:$0xff]
    %v56 = vld [vmem:[#allocation5 + $0x48] sm:$0xff]
    %v57 = vld [vmem:[#allocation5 + $0x50] sm:$0xff]
    %v58 = vld [vmem:[#allocation5 + $0x58] sm:$0xff]
    %v59 = vld [vmem:[#allocation5 + $0x60] sm:$0xff]
    %v60 = vld [vmem:[#allocation5 + $0x68] sm:$0xff]
    %v61 = vld [vmem:[#allocation5 + $0x70] sm:$0xff]
    %v62 = vld [vmem:[#allocation5 + $0x78] sm:$0xff]
    %63 = vmatprep.subr.mxu0 0.0
    %64 = vmatpush1.msra.mxu0 %v62
    %65 = vmatprep.subr.mxu0 0.0
    %66 = vmatpush1.msra.mxu0 %v61
    %67 = vmatprep.subr.mxu0 0.0
    %68 = vmatpush1.msra.mxu0 %v60
    %69 = vmatprep.subr.mxu0 0.0
    %70 = vmatpush1.msra.mxu0 %v59
    %71 = vmatprep.subr.mxu0 0.0
    %72 = vmatpush1.msra.mxu0 %v58
    %73 = vmatprep.subr.mxu0 0.0
    %74 = vmatpush1.msra.mxu0 %v57
    %75 = vmatprep.subr.mxu0 0.0
    %76 = vmatpush1.msra.mxu0 %v56
    %77 = vmatprep.subr.mxu0 0.0
    %78 = vmatpush1.msra.mxu0 %v55
    %79 = vmatprep.subr.mxu0 0.0
    %80 = vmatpush1.msra.mxu0 %v54
    %81 = vmatprep.subr.mxu0 0.0
    %82 = vmatpush1.msra.mxu0 %v53
    %83 = vmatprep.subr.mxu0 0.0
    %84 = vmatpush1.msra.mxu0 %v52
    %85 = vmatprep.subr.mxu0 0.0
    %86 = vmatpush1.msra.mxu0 %v51
    %87 = vmatprep.subr.mxu0 0.0
    %88 = vmatpush1.msra.mxu0 %v50
    %89 = vmatprep.subr.mxu0 0.0
    %90 = vmatpush1.msra.mxu0 %v49
    %91 = vmatprep.subr.mxu0 0.0
    %92 = vmatpush1.msra.mxu0 %v48
    %93 = vmatprep.subr.mxu0 0.0
    %94 = vmatpush1.msra.mxu0 %v47
    %95 = vmatprep.subr.mxu0 0.0
    %96 = vmatpush2.msra.mxu0 0.0
    %97 = vmatprep.subr.mxu0 0.0
    %98 = vmatpush2.msra.mxu0 0.0
    %99 = vmatprep.subr.mxu0 0.0
    %100 = vmatpush2.msra.mxu0 0.0
    %101 = vmatprep.subr.mxu0 0.0
    %102 = vmatpush2.msra.mxu0 0.0
    %103 = vmatprep.subr.mxu0 0.0
    %104 = vmatpush2.msra.mxu0 0.0
    %105 = vmatprep.subr.mxu0 0.0
    %106 = vmatpush2.msra.mxu0 0.0
    %107 = vmatprep.subr.mxu0 0.0
    %108 = vmatpush2.msra.mxu0 0.0
    %109 = vmatprep.subr.mxu0 0.0
    %110 = vmatpush2.msra.mxu0 0.0
    %111 = vmatprep.subr.mxu0 0.0
    %112 = vmatpush2.msra.mxu0 0.0
    %113 = vmatprep.subr.mxu0 0.0
    %114 = vmatpush2.msra.mxu0 0.0
    %115 = vmatprep.subr.mxu0 0.0
    %116 = vmatpush2.msra.mxu0 0.0
    %117 = vmatprep.subr.mxu0 0.0
    %118 = vmatpush2.msra.mxu0 0.0
    %119 = vmatprep.subr.mxu0 0.0
    %120 = vmatpush2.msra.mxu0 0.0
    %121 = vmatprep.subr.mxu0 0.0
    %122 = vmatpush2.msra.mxu0 0.0
    %123 = vmatprep.subr.mxu0 0.0
    %124 = vmatpush2.msra.mxu0 0.0
    %125 = vmatprep.subr.mxu0 0.0
    %126 = vmatpush2.msra.mxu0 0.0
    %127 = vmatprep.mubr.f32.mxu0 0.0
    %128 = vmatmul.mubr.f32.gmra.mxu0 %v44
    %v129 = vpop.f32.mrf.mxu0
    %v130 = vadd.f32 0.0, %v129
    %v131 = vpop.f32.mrf.mxu0
    %132 = vdwg.mxu0
    %v133 = vmul.f32 %v130, 0.03125
    %v134 = vsub.f32 %v44, %v133
    %v135 = vmul.f32 %v134, %v134
    %136 = vmatprep.subr.mxu0 0.0
    %137 = vmatpush1.msra.mxu0 %v62
    %138 = vmatprep.subr.mxu0 0.0
    %139 = vmatpush1.msra.mxu0 %v61
    %140 = vmatprep.subr.mxu0 0.0
    %141 = vmatpush1.msra.mxu0 %v60
    %142 = vmatprep.subr.mxu0 0.0
    %143 = vmatpush1.msra.mxu0 %v59
    %144 = vmatprep.subr.mxu0 0.0
    %145 = vmatpush1.msra.mxu0 %v58
    %146 = vmatprep.subr.mxu0 0.0
    %147 = vmatpush1.msra.mxu0 %v57
    %148 = vmatprep.subr.mxu0 0.0
    %149 = vmatpush1.msra.mxu0 %v56
    %150 = vmatprep.subr.mxu0 0.0
    %151 = vmatpush1.msra.mxu0 %v55
    %152 = vmatprep.subr.mxu0 0.0
    %153 = vmatpush1.msra.mxu0 %v54
    %154 = vmatprep.subr.mxu0 0.0
    %155 = vmatpush1.msra.mxu0 %v53
    %156 = vmatprep.subr.mxu0 0.0
    %157 = vmatpush1.msra.mxu0 %v52
    %158 = vmatprep.subr.mxu0 0.0
    %159 = vmatpush1.msra.mxu0 %v51
    %160 = vmatprep.subr.mxu0 0.0
    %161 = vmatpush1.msra.mxu0 %v50
    %162 = vmatprep.subr.mxu0 0.0
    %163 = vmatpush1.msra.mxu0 %v49
    %164 = vmatprep.subr.mxu0 0.0
    %165 = vmatpush1.msra.mxu0 %v48
    %166 = vmatprep.subr.mxu0 0.0
    %167 = vmatpush1.msra.mxu0 %v47
    %168 = vmatprep.subr.mxu0 0.0
    %169 = vmatpush2.msra.mxu0 0.0
    %170 = vmatprep.subr.mxu0 0.0
    %171 = vmatpush2.msra.mxu0 0.0
    %172 = vmatprep.subr.mxu0 0.0
    %173 = vmatpush2.msra.mxu0 0.0
    %174 = vmatprep.subr.mxu0 0.0
    %175 = vmatpush2.msra.mxu0 0.0
    %176 = vmatprep.subr.mxu0 0.0
    %177 = vmatpush2.msra.mxu0 0.0
    %178 = vmatprep.subr.mxu0 0.0
    %179 = vmatpush2.msra.mxu0 0.0
    %180 = vmatprep.subr.mxu0 0.0
    %181 = vmatpush2.msra.mxu0 0.0
    %182 = vmatprep.subr.mxu0 0.0
    %183 = vmatpush2.msra.mxu0 0.0
    %184 = vmatprep.subr.mxu0 0.0
    %185 = vmatpush2.msra.mxu0 0.0
    %186 = vmatprep.subr.mxu0 0.0
    %187 = vmatpush2.msra.mxu0 0.0
    %188 = vmatprep.subr.mxu0 0.0
    %189 = vmatpush2.msra.mxu0 0.0
    %190 = vmatprep.subr.mxu0 0.0
    %191 = vmatpush2.msra.mxu0 0.0
    %192 = vmatprep.subr.mxu0 0.0
    %193 = vmatpush2.msra.mxu0 0.0
    %194 = vmatprep.subr.mxu0 0.0
    %195 = vmatpush2.msra.mxu0 0.0
    %196 = vmatprep.subr.mxu0 0.0
    %197 = vmatpush2.msra.mxu0 0.0
    %198 = vmatprep.subr.mxu0 0.0
    %199 = vmatpush2.msra.mxu0 0.0
    %200 = vmatprep.mubr.f32.mxu0 0.0
    %201 = vmatmul.mubr.f32.gmra.mxu0 %v135
    %v202 = vpop.f32.mrf.mxu0
    %v203 = vadd.f32 0.0, %v202
    %v204 = vpop.f32.mrf.mxu0
    %205 = vdwg.mxu0
    %v206 = vmul.f32 %v203, 0.032258064
    %v207 = vrsqrt.pop %v206
    %v208 = vmul.f32 %v206, %v207
    %vm209 = vcmp.eq.f32.partialorder %v206, inf
    %v210 = vsel %vm209, %v206, %v208
    %vm211 = vcmp.eq.f32.partialorder %v206, 0.0
    %v212 = vand.u32 %v206, 2147483648
    %v213 = vsel %vm211, %v212, %v210
    %v214 = vadd.f32 %v213, 1e-06
    %v215 = vrcp.pop %v214
    %v217 = vlaneseq
    %v218 = vshrl.u32 %v217, 7
    %v219 = vsub.s32 0, %v218
    %v220 = vrot.slane %v45, %v219
    %v222 = vmul.f32 %v220, %v134
    %v223 = vmul.f32 %v222, %v215
    %v225 = vlaneseq
    %v226 = vshrl.u32 %v225, 7
    %v227 = vsub.s32 0, %v226
    %v228 = vrot.slane %v46, %v227
    %v230 = vadd.f32 %v223, %v228
    %231 = vst [vmem:[#allocation7] sm:$0xf] %v230
    // Predicated region
    $region26: #{tpu_custom_call.1} parent=1 // pred_check
      _
    $region27: #{tpu_custom_call.1} parent=1 // pred_check_branch
      %233 = sbr.rel (0) target = $region29
    $region28: #{tpu_custom_call.1} parent=1 // pred_region
      %s235 = ssub.s32 64, 64
      %236 = vsyncadd [#allocation4], %s235
      %s238 = sshll.u32 [#allocation7], 4
      %s239 = int_to_ptr.vmem [resolvable:$true] %s238
      %241 = dma.vmem_to_hbm [thread:$0]  %s239, 64, %s4, [#allocation4]
    $region29: #{tpu_custom_call.1} parent=1 // pred_fallthru
      _
    // Predicated region
    $region30: #{tpu_custom_call.1} parent=1 // pred_check
      _
    $region31: #{tpu_custom_call.1} parent=1 // pred_check_branch
      %243 = sbr.rel (0) target = $region33
    $region32: #{tpu_custom_call.1} parent=1 // pred_region
      %244 = dma.done [#allocation4], 64
    $region33: #{tpu_custom_call.1} parent=1 // pred_fallthru
      _
    %245 = vsyncpa [#allocation3], 1
    %246 = vsyncpa [#allocation6], 1
    %247 = vsyncpa [#allocation4], 1

</llo_original>
